<compile_context>
chip_gen: v5e
topology: v5e:2x2
jax: 0.10.0
libtpu: 0.0.40
codegen_flags: <defaults>
</compile_context>

<pallas_src>
import functools

import jax
import jax.numpy as jnp
from jax.experimental import pallas as pl
from jax.experimental.pallas import tpu as pltpu


def _round_up(v, m):
    return ((v + m - 1) // m) * m


def _pick_batch_tile(B, block_b, sublane):
    """Sublane-aligned batch tile, capped at block_b, aiming for >=2 grid
    steps once B allows (pipelining + v7x dual-TC sharding)."""
    half = _round_up(max(1, -(-B // 2)), sublane)
    tb = max(sublane, min(block_b, half))
    return min(tb, _round_up(B, sublane))


# ----------------------------------------------------------------------------
# Fused post-FE chain kernel (one batch tile per grid step).
# ----------------------------------------------------------------------------
def _gfcd_chain_kernel(feat_ref, di_wt_ref, di_b_ref, cl_wt_ref, cl_b_ref,
                       d1_wt_ref, d1_b_ref, d3_wt_ref, d3_b_ref,
                       xdi_ref, cls_ref, pred_ref,
                       *, num_classes, h_pad, mxu_dtype, approx_sigmoid):
    def mm(a, w):
        if mxu_dtype is not None:          # optional bf16 MXU operands (v6e/v7x)
            a = a.astype(mxu_dtype)
            w = w.astype(mxu_dtype)
        return jnp.dot(a, w, preferred_element_type=jnp.float32)

    feat = feat_ref[...]                                    # (TB, K_pad)

    x_di = mm(feat, di_wt_ref[...]) + di_b_ref[...]         # (TB, E_pad)
    cls = mm(x_di, cl_wt_ref[...]) + cl_b_ref[...]          # (TB, C_pad)
    xdi_ref[...] = x_di.astype(xdi_ref.dtype)
    cls_ref[...] = cls.astype(cls_ref.dtype)

    # Per-sample outer product folded algebraically into the D1 matmul:
    #   op[b, c*E+e] = cls[b,c] * x_di[b,e]
    #   h = relu(op @ Wd1^T + b1)
    #     = relu( sum_c cls[:, c:c+1] * (x_di @ Wd1_slab[c]) + b1 )
    acc = jnp.zeros((x_di.shape[0], h_pad), jnp.float32)
    for c in range(num_classes):           # static unroll; num_classes small
        acc = acc + cls[:, c:c + 1] * mm(x_di, d1_wt_ref[c])
    h = jnp.maximum(acc + d1_b_ref[...], 0.0)               # (TB, H_pad)

    z = mm(h, d3_wt_ref[...]) + d3_b_ref[...]               # (TB, 128)
    pred = pl.reciprocal(1.0 + jnp.exp(-z), approx=approx_sigmoid)
    pred_ref[...] = pred.astype(pred_ref.dtype)


# ----------------------------------------------------------------------------
# One-time parameter prep (transpose + lane padding), outside the hot path.
# ----------------------------------------------------------------------------
def prepare_gfcd_params(W_di, b_di, W_cl, b_cl, W_d1, b_d1, W_d3, b_d3):
    """Transpose to (K, N) matmul layout and zero-pad every dim to 128
    multiples so all loads/stores are unmasked and MXU tiles are clean.
    Zero padding is exact: padded input lanes meet zero weight rows; padded
    output lanes are sliced off once at the end of the chain."""
    E, K = W_di.shape            # end_feat, in_features
    C = W_cl.shape[0]            # num_classes
    H = W_d1.shape[0]            # adv hidden
    K_pad, E_pad = _round_up(K, 128), _round_up(E, 128)
    C_pad, H_pad = _round_up(C, 128), _round_up(H, 128)
    N3_pad = 128

    f32 = jnp.float32
    di_wt = jnp.zeros((K_pad, E_pad), f32).at[:K, :E].set(W_di.T)
    di_b = jnp.zeros((1, E_pad), f32).at[0, :E].set(b_di)
    cl_wt = jnp.zeros((E_pad, C_pad), f32).at[:E, :C].set(W_cl.T)
    cl_b = jnp.zeros((1, C_pad), f32).at[0, :C].set(b_cl)
    # W_d1: [H, C*E]; slab c = W_d1[:, c*E:(c+1)*E].T  -> (E, H)
    slabs = jnp.transpose(W_d1.reshape(H, C, E), (1, 2, 0))      # (C, E, H)
    d1_wt = jnp.zeros((C, E_pad, H_pad), f32).at[:, :E, :H].set(slabs)
    d1_b = jnp.zeros((1, H_pad), f32).at[0, :H].set(b_d1)
    d3_wt = jnp.zeros((H_pad, N3_pad), f32).at[:H, :1].set(W_d3.T)
    d3_b = jnp.zeros((1, N3_pad), f32).at[0, :1].set(b_d3)

    params = (di_wt, di_b, cl_wt, cl_b, d1_wt, d1_b, d3_wt, d3_b)
    meta = dict(K=K, K_pad=K_pad, E=E, E_pad=E_pad, C=C, C_pad=C_pad,
                H=H, H_pad=H_pad, N3_pad=N3_pad)
    return params, meta


# ----------------------------------------------------------------------------
# GFCD eval-mode forward (after the FE backbone): one fused pallas_call.
# ----------------------------------------------------------------------------
def gfcd_eval_forward(feat, params, meta, *, block_b=256, mxu_dtype=None,
                      approx_sigmoid=False):
    (di_wt, di_b, cl_wt, cl_b, d1_wt, d1_b, d3_wt, d3_b) = params
    B, K = feat.shape
    assert K == meta["K"]
    K_pad, E_pad = meta["K_pad"], meta["E_pad"]
    C, C_pad = meta["C"], meta["C_pad"]
    H_pad, N3_pad = meta["H_pad"], meta["N3_pad"]

    if K_pad != K:                   # single lane-pad of the streamed input
        feat = jnp.pad(feat, ((0, 0), (0, K_pad - K)))

    sublane = 16 if mxu_dtype == jnp.bfloat16 else 8
    TB = _pick_batch_tile(B, block_b, sublane)
    grid = (pl.cdiv(B, TB),)

    kernel = functools.partial(
        _gfcd_chain_kernel, num_classes=C, h_pad=H_pad,
        mxu_dtype=mxu_dtype, approx_sigmoid=approx_sigmoid)

    flops = 2 * B * (K_pad * E_pad + E_pad * C_pad + C * E_pad * H_pad
                     + H_pad * N3_pad)
    bytes_accessed = 4 * (B * K_pad + di_wt.size + cl_wt.size + d1_wt.size
                          + d3_wt.size + B * (E_pad + C_pad + N3_pad))

    const2 = lambda i: (0, 0)
    const3 = lambda i: (0, 0, 0)
    batch = lambda i: (i, 0)

    x_di_p, cls_p, pred_p = pl.pallas_call(
        kernel,
        out_shape=(jax.ShapeDtypeStruct((B, E_pad), feat.dtype),
                   jax.ShapeDtypeStruct((B, C_pad), feat.dtype),
                   jax.ShapeDtypeStruct((B, N3_pad), feat.dtype)),
        grid_spec=pl.GridSpec(
            grid=grid,
            in_specs=[
                pl.BlockSpec((TB, K_pad), batch),          # streamed input
                pl.BlockSpec((K_pad, E_pad), const2),      # resident weights
                pl.BlockSpec((1, E_pad), const2),
                pl.BlockSpec((E_pad, C_pad), const2),
                pl.BlockSpec((1, C_pad), const2),
                pl.BlockSpec(d1_wt.shape, const3),
                pl.BlockSpec((1, H_pad), const2),
                pl.BlockSpec((H_pad, N3_pad), const2),
                pl.BlockSpec((1, N3_pad), const2),
            ],
            out_specs=[
                pl.BlockSpec((TB, E_pad), batch),
                pl.BlockSpec((TB, C_pad), batch),
                pl.BlockSpec((TB, N3_pad), batch),
            ],
        ),
        compiler_params=pltpu.CompilerParams(
            dimension_semantics=("parallel",)),            # v7x: 2 TCs
        cost_estimate=pl.CostEstimate(flops=flops,
                                      transcendentals=B * N3_pad,
                                      bytes_accessed=bytes_accessed),
    )(feat, di_wt, di_b, cl_wt, cl_b, d1_wt, d1_b, d3_wt, d3_b)

    x_di = x_di_p[:, :meta["E"]]
    cls_out = cls_p[:, :C]
    pred_domain = pred_p[:, :1]
    return x_di, cls_out, pred_domain


if __name__ == "__main__":
    # Small shapes consistent with the module defaults (scaled down).
    B = 8
    in_features = 200        # flattened FE output width (stand-in for FE(x))
    end_feat = 128
    num_classes = 10
    adv_hidden = 64

    key = jax.random.PRNGKey(0)
    ks = jax.random.split(key, 9)
    feat = jax.random.normal(ks[0], (B, in_features), dtype=jnp.float32)

    def init_linear(kw, kb, n_out, n_in):
        bound = 1.0 / (n_in ** 0.5)
        w = jax.random.uniform(kw, (n_out, n_in), minval=-bound, maxval=bound,
                               dtype=jnp.float32)
        b = jax.random.uniform(kb, (n_out,), minval=-bound, maxval=bound,
                               dtype=jnp.float32)
        return w, b

    W_di, b_di = init_linear(ks[1], ks[2], end_feat, in_features)
    W_cl, b_cl = init_linear(ks[3], ks[4], num_classes, end_feat)
    W_d1, b_d1 = init_linear(ks[5], ks[6], adv_hidden, end_feat * num_classes)
    W_d3, b_d3 = init_linear(ks[7], ks[8], 1, adv_hidden)

    params, meta = prepare_gfcd_params(W_di, b_di, W_cl, b_cl,
                                       W_d1, b_d1, W_d3, b_d3)

    # mxu_dtype=jnp.bfloat16 / approx_sigmoid=True are the production knobs
    # for v6e/v7x; kept off here to meet the strict f32 tolerance check.
    fwd = jax.jit(functools.partial(gfcd_eval_forward, meta=meta,
                                    mxu_dtype=None, approx_sigmoid=False))
    x_di, cls_out, pred = jax.block_until_ready(fwd(feat, params))

    # Plain-JAX reference of the same eval-mode forward.
    x_di_r = feat @ W_di.T + b_di
    cls_r = x_di_r @ W_cl.T + b_cl
    op_r = (cls_r[:, :, None] * x_di_r[:, None, :]).reshape(B, -1)
    h_r = jnp.maximum(op_r @ W_d1.T + b_d1, 0.0)
    pred_r = jax.nn.sigmoid(h_r @ W_d3.T + b_d3)

    assert x_di.shape == (B, end_feat)
    assert cls_out.shape == (B, num_classes)
    assert pred.shape == (B, 1)
    assert jnp.allclose(x_di, x_di_r, atol=5e-4, rtol=5e-4)
    assert jnp.allclose(cls_out, cls_r, atol=5e-4, rtol=5e-4)
    assert jnp.allclose(pred, pred_r, atol=5e-4, rtol=5e-4)

    print("KERNEL_OK")
</pallas_src>

<mosaic_0001>
module attributes {stable_mosaic.version = 11 : i64} {
  func.func @_gfcd_chain_kernel(%arg0: i32, %arg1: memref<8x256xf32, #tpu.memory_space<vmem>>, %arg2: memref<256x128xf32, #tpu.memory_space<vmem>>, %arg3: memref<1x128xf32, #tpu.memory_space<vmem>>, %arg4: memref<128x128xf32, #tpu.memory_space<vmem>>, %arg5: memref<1x128xf32, #tpu.memory_space<vmem>>, %arg6: memref<10x128x128xf32, #tpu.memory_space<vmem>>, %arg7: memref<1x128xf32, #tpu.memory_space<vmem>>, %arg8: memref<128x128xf32, #tpu.memory_space<vmem>>, %arg9: memref<1x128xf32, #tpu.memory_space<vmem>>, %arg10: memref<8x128xf32, #tpu.memory_space<vmem>>, %arg11: memref<8x128xf32, #tpu.memory_space<vmem>>, %arg12: memref<8x128xf32, #tpu.memory_space<vmem>>) attributes {dimension_semantics = [#tpu.dimension_semantics<parallel>], iteration_bounds = array<i64: 1>, scalar_prefetch = 0 : i64, scratch_operands = 0 : i64, tpu.core_type = #tpu.core_type<tc>, window_params = [{transform_indices = @transform_0, window_bounds = array<i64: 8, 256>}, {pipeline_mode = #tpu.pipeline_mode<synchronous>, transform_indices = @transform_1, window_bounds = array<i64: 256, 128>}, {pipeline_mode = #tpu.pipeline_mode<synchronous>, transform_indices = @transform_2, window_bounds = array<i64: 1, 128>}, {pipeline_mode = #tpu.pipeline_mode<synchronous>, transform_indices = @transform_3, window_bounds = array<i64: 128, 128>}, {pipeline_mode = #tpu.pipeline_mode<synchronous>, transform_indices = @transform_4, window_bounds = array<i64: 1, 128>}, {pipeline_mode = #tpu.pipeline_mode<synchronous>, transform_indices = @transform_5, window_bounds = array<i64: 10, 128, 128>}, {pipeline_mode = #tpu.pipeline_mode<synchronous>, transform_indices = @transform_6, window_bounds = array<i64: 1, 128>}, {pipeline_mode = #tpu.pipeline_mode<synchronous>, transform_indices = @transform_7, window_bounds = array<i64: 128, 128>}, {pipeline_mode = #tpu.pipeline_mode<synchronous>, transform_indices = @transform_8, window_bounds = array<i64: 1, 128>}, {transform_indices = @transform_9, window_bounds = array<i64: 8, 128>}, {transform_indices = @transform_10, window_bounds = array<i64: 8, 128>}, {transform_indices = @transform_11, window_bounds = array<i64: 8, 128>}]} {
    %c0 = arith.constant 0 : index
    %c0_0 = arith.constant 0 : index
    %0 = vector.load %arg1[%c0, %c0_0] : memref<8x256xf32, #tpu.memory_space<vmem>>, vector<8x256xf32>
    %c0_1 = arith.constant 0 : index
    %c0_2 = arith.constant 0 : index
    %1 = vector.load %arg2[%c0_1, %c0_2] : memref<256x128xf32, #tpu.memory_space<vmem>>, vector<256x128xf32>
    %cst = arith.constant dense<0.000000e+00> : vector<8x128xf32>
    %2 = tpu.matmul %0, %1, %cst {dimension_numbers = #tpu.dot_dimension_numbers<[1], [0], [0], [1], [0, 0, 1, 1], [], []>} : vector<8x256xf32>, vector<256x128xf32>, vector<8x128xf32> -> vector<8x128xf32>
    %c0_3 = arith.constant 0 : index
    %c0_4 = arith.constant 0 : index
    %3 = vector.load %arg3[%c0_3, %c0_4] : memref<1x128xf32, #tpu.memory_space<vmem>>, vector<1x128xf32>
    %4 = vector.broadcast %3 : vector<1x128xf32> to vector<8x128xf32>
    %5 = arith.addf %2, %4 : vector<8x128xf32>
    %c0_5 = arith.constant 0 : index
    %c0_6 = arith.constant 0 : index
    %6 = vector.load %arg4[%c0_5, %c0_6] : memref<128x128xf32, #tpu.memory_space<vmem>>, vector<128x128xf32>
    %cst_7 = arith.constant dense<0.000000e+00> : vector<8x128xf32>
    %7 = tpu.matmul %5, %6, %cst_7 {dimension_numbers = #tpu.dot_dimension_numbers<[1], [0], [0], [1], [0, 0, 1, 1], [], []>} : vector<8x128xf32>, vector<128x128xf32>, vector<8x128xf32> -> vector<8x128xf32>
    %c0_8 = arith.constant 0 : index
    %c0_9 = arith.constant 0 : index
    %8 = vector.load %arg5[%c0_8, %c0_9] : memref<1x128xf32, #tpu.memory_space<vmem>>, vector<1x128xf32>
    %9 = vector.broadcast %8 : vector<1x128xf32> to vector<8x128xf32>
    %10 = arith.addf %7, %9 : vector<8x128xf32>
    %c0_10 = arith.constant 0 : index
    %c0_11 = arith.constant 0 : index
    %11 = vector.load %arg10[%c0_10, %c0_11] : memref<8x128xf32, #tpu.memory_space<vmem>>, vector<8x128xf32>
    tpu.vector_store %arg10[%c0_10, %c0_11], %5 {strides = array<i32>} : memref<8x128xf32, #tpu.memory_space<vmem>>, vector<8x128xf32>,
    %c0_12 = arith.constant 0 : index
    %c0_13 = arith.constant 0 : index
    %12 = vector.load %arg11[%c0_12, %c0_13] : memref<8x128xf32, #tpu.memory_space<vmem>>, vector<8x128xf32>
    tpu.vector_store %arg11[%c0_12, %c0_13], %10 {strides = array<i32>} : memref<8x128xf32, #tpu.memory_space<vmem>>, vector<8x128xf32>,
    %cst_14 = arith.constant 0.000000e+00 : f32
    %13 = vector.broadcast %cst_14 : f32 to vector<8x128xf32>
    %14 = vector.extract_strided_slice %10 {offsets = [0, 0], sizes = [8, 1], strides = [1, 1]} : vector<8x128xf32> to vector<8x1xf32>
    %c0_15 = arith.constant 0 : index
    %c0_16 = arith.constant 0 : index
    %c0_17 = arith.constant 0 : index
    %15 = vector.load %arg6[%c0_15, %c0_16, %c0_17] : memref<10x128x128xf32, #tpu.memory_space<vmem>>, vector<1x128x128xf32>
    %16 = vector.shape_cast %15 : vector<1x128x128xf32> to vector<128x128xf32>
    %cst_18 = arith.constant dense<0.000000e+00> : vector<8x128xf32>
    %17 = tpu.matmul %5, %16, %cst_18 {dimension_numbers = #tpu.dot_dimension_numbers<[1], [0], [0], [1], [0, 0, 1, 1], [], []>} : vector<8x128xf32>, vector<128x128xf32>, vector<8x128xf32> -> vector<8x128xf32>
    %18 = vector.broadcast %14 : vector<8x1xf32> to vector<8x128xf32>
    %19 = arith.mulf %18, %17 : vector<8x128xf32>
    %20 = arith.addf %13, %19 : vector<8x128xf32>
    %21 = vector.extract_strided_slice %10 {offsets = [0, 1], sizes = [8, 1], strides = [1, 1]} : vector<8x128xf32> to vector<8x1xf32>
    %c1 = arith.constant 1 : index
    %c0_19 = arith.constant 0 : index
    %c0_20 = arith.constant 0 : index
    %22 = vector.load %arg6[%c1, %c0_19, %c0_20] : memref<10x128x128xf32, #tpu.memory_space<vmem>>, vector<1x128x128xf32>
    %23 = vector.shape_cast %22 : vector<1x128x128xf32> to vector<128x128xf32>
    %cst_21 = arith.constant dense<0.000000e+00> : vector<8x128xf32>
    %24 = tpu.matmul %5, %23, %cst_21 {dimension_numbers = #tpu.dot_dimension_numbers<[1], [0], [0], [1], [0, 0, 1, 1], [], []>} : vector<8x128xf32>, vector<128x128xf32>, vector<8x128xf32> -> vector<8x128xf32>
    %25 = vector.broadcast %21 : vector<8x1xf32> to vector<8x128xf32>
    %26 = arith.mulf %25, %24 : vector<8x128xf32>
    %27 = arith.addf %20, %26 : vector<8x128xf32>
    %28 = vector.extract_strided_slice %10 {offsets = [0, 2], sizes = [8, 1], strides = [1, 1]} : vector<8x128xf32> to vector<8x1xf32>
    %c2 = arith.constant 2 : index
    %c0_22 = arith.constant 0 : index
    %c0_23 = arith.constant 0 : index
    %29 = vector.load %arg6[%c2, %c0_22, %c0_23] : memref<10x128x128xf32, #tpu.memory_space<vmem>>, vector<1x128x128xf32>
    %30 = vector.shape_cast %29 : vector<1x128x128xf32> to vector<128x128xf32>
    %cst_24 = arith.constant dense<0.000000e+00> : vector<8x128xf32>
    %31 = tpu.matmul %5, %30, %cst_24 {dimension_numbers = #tpu.dot_dimension_numbers<[1], [0], [0], [1], [0, 0, 1, 1], [], []>} : vector<8x128xf32>, vector<128x128xf32>, vector<8x128xf32> -> vector<8x128xf32>
    %32 = vector.broadcast %28 : vector<8x1xf32> to vector<8x128xf32>
    %33 = arith.mulf %32, %31 : vector<8x128xf32>
    %34 = arith.addf %27, %33 : vector<8x128xf32>
    %35 = vector.extract_strided_slice %10 {offsets = [0, 3], sizes = [8, 1], strides = [1, 1]} : vector<8x128xf32> to vector<8x1xf32>
    %c3 = arith.constant 3 : index
    %c0_25 = arith.constant 0 : index
    %c0_26 = arith.constant 0 : index
    %36 = vector.load %arg6[%c3, %c0_25, %c0_26] : memref<10x128x128xf32, #tpu.memory_space<vmem>>, vector<1x128x128xf32>
    %37 = vector.shape_cast %36 : vector<1x128x128xf32> to vector<128x128xf32>
    %cst_27 = arith.constant dense<0.000000e+00> : vector<8x128xf32>
    %38 = tpu.matmul %5, %37, %cst_27 {dimension_numbers = #tpu.dot_dimension_numbers<[1], [0], [0], [1], [0, 0, 1, 1], [], []>} : vector<8x128xf32>, vector<128x128xf32>, vector<8x128xf32> -> vector<8x128xf32>
    %39 = vector.broadcast %35 : vector<8x1xf32> to vector<8x128xf32>
    %40 = arith.mulf %39, %38 : vector<8x128xf32>
    %41 = arith.addf %34, %40 : vector<8x128xf32>
    %42 = vector.extract_strided_slice %10 {offsets = [0, 4], sizes = [8, 1], strides = [1, 1]} : vector<8x128xf32> to vector<8x1xf32>
    %c4 = arith.constant 4 : index
    %c0_28 = arith.constant 0 : index
    %c0_29 = arith.constant 0 : index
    %43 = vector.load %arg6[%c4, %c0_28, %c0_29] : memref<10x128x128xf32, #tpu.memory_space<vmem>>, vector<1x128x128xf32>
    %44 = vector.shape_cast %43 : vector<1x128x128xf32> to vector<128x128xf32>
    %cst_30 = arith.constant dense<0.000000e+00> : vector<8x128xf32>
    %45 = tpu.matmul %5, %44, %cst_30 {dimension_numbers = #tpu.dot_dimension_numbers<[1], [0], [0], [1], [0, 0, 1, 1], [], []>} : vector<8x128xf32>, vector<128x128xf32>, vector<8x128xf32> -> vector<8x128xf32>
    %46 = vector.broadcast %42 : vector<8x1xf32> to vector<8x128xf32>
    %47 = arith.mulf %46, %45 : vector<8x128xf32>
    %48 = arith.addf %41, %47 : vector<8x128xf32>
    %49 = vector.extract_strided_slice %10 {offsets = [0, 5], sizes = [8, 1], strides = [1, 1]} : vector<8x128xf32> to vector<8x1xf32>
    %c5 = arith.constant 5 : index
    %c0_31 = arith.constant 0 : index
    %c0_32 = arith.constant 0 : index
    %50 = vector.load %arg6[%c5, %c0_31, %c0_32] : memref<10x128x128xf32, #tpu.memory_space<vmem>>, vector<1x128x128xf32>
    %51 = vector.shape_cast %50 : vector<1x128x128xf32> to vector<128x128xf32>
    %cst_33 = arith.constant dense<0.000000e+00> : vector<8x128xf32>
    %52 = tpu.matmul %5, %51, %cst_33 {dimension_numbers = #tpu.dot_dimension_numbers<[1], [0], [0], [1], [0, 0, 1, 1], [], []>} : vector<8x128xf32>, vector<128x128xf32>, vector<8x128xf32> -> vector<8x128xf32>
    %53 = vector.broadcast %49 : vector<8x1xf32> to vector<8x128xf32>
    %54 = arith.mulf %53, %52 : vector<8x128xf32>
    %55 = arith.addf %48, %54 : vector<8x128xf32>
    %56 = vector.extract_strided_slice %10 {offsets = [0, 6], sizes = [8, 1], strides = [1, 1]} : vector<8x128xf32> to vector<8x1xf32>
    %c6 = arith.constant 6 : index
    %c0_34 = arith.constant 0 : index
    %c0_35 = arith.constant 0 : index
    %57 = vector.load %arg6[%c6, %c0_34, %c0_35] : memref<10x128x128xf32, #tpu.memory_space<vmem>>, vector<1x128x128xf32>
    %58 = vector.shape_cast %57 : vector<1x128x128xf32> to vector<128x128xf32>
    %cst_36 = arith.constant dense<0.000000e+00> : vector<8x128xf32>
    %59 = tpu.matmul %5, %58, %cst_36 {dimension_numbers = #tpu.dot_dimension_numbers<[1], [0], [0], [1], [0, 0, 1, 1], [], []>} : vector<8x128xf32>, vector<128x128xf32>, vector<8x128xf32> -> vector<8x128xf32>
    %60 = vector.broadcast %56 : vector<8x1xf32> to vector<8x128xf32>
    %61 = arith.mulf %60, %59 : vector<8x128xf32>
    %62 = arith.addf %55, %61 : vector<8x128xf32>
    %63 = vector.extract_strided_slice %10 {offsets = [0, 7], sizes = [8, 1], strides = [1, 1]} : vector<8x128xf32> to vector<8x1xf32>
    %c7 = arith.constant 7 : index
    %c0_37 = arith.constant 0 : index
    %c0_38 = arith.constant 0 : index
    %64 = vector.load %arg6[%c7, %c0_37, %c0_38] : memref<10x128x128xf32, #tpu.memory_space<vmem>>, vector<1x128x128xf32>
    %65 = vector.shape_cast %64 : vector<1x128x128xf32> to vector<128x128xf32>
    %cst_39 = arith.constant dense<0.000000e+00> : vector<8x128xf32>
    %66 = tpu.matmul %5, %65, %cst_39 {dimension_numbers = #tpu.dot_dimension_numbers<[1], [0], [0], [1], [0, 0, 1, 1], [], []>} : vector<8x128xf32>, vector<128x128xf32>, vector<8x128xf32> -> vector<8x128xf32>
    %67 = vector.broadcast %63 : vector<8x1xf32> to vector<8x128xf32>
    %68 = arith.mulf %67, %66 : vector<8x128xf32>
    %69 = arith.addf %62, %68 : vector<8x128xf32>
    %70 = vector.extract_strided_slice %10 {offsets = [0, 8], sizes = [8, 1], strides = [1, 1]} : vector<8x128xf32> to vector<8x1xf32>
    %c8 = arith.constant 8 : index
    %c0_40 = arith.constant 0 : index
    %c0_41 = arith.constant 0 : index
    %71 = vector.load %arg6[%c8, %c0_40, %c0_41] : memref<10x128x128xf32, #tpu.memory_space<vmem>>, vector<1x128x128xf32>
    %72 = vector.shape_cast %71 : vector<1x128x128xf32> to vector<128x128xf32>
    %cst_42 = arith.constant dense<0.000000e+00> : vector<8x128xf32>
    %73 = tpu.matmul %5, %72, %cst_42 {dimension_numbers = #tpu.dot_dimension_numbers<[1], [0], [0], [1], [0, 0, 1, 1], [], []>} : vector<8x128xf32>, vector<128x128xf32>, vector<8x128xf32> -> vector<8x128xf32>
    %74 = vector.broadcast %70 : vector<8x1xf32> to vector<8x128xf32>
    %75 = arith.mulf %74, %73 : vector<8x128xf32>
    %76 = arith.addf %69, %75 : vector<8x128xf32>
    %77 = vector.extract_strided_slice %10 {offsets = [0, 9], sizes = [8, 1], strides = [1, 1]} : vector<8x128xf32> to vector<8x1xf32>
    %c9 = arith.constant 9 : index
    %c0_43 = arith.constant 0 : index
    %c0_44 = arith.constant 0 : index
    %78 = vector.load %arg6[%c9, %c0_43, %c0_44] : memref<10x128x128xf32, #tpu.memory_space<vmem>>, vector<1x128x128xf32>
    %79 = vector.shape_cast %78 : vector<1x128x128xf32> to vector<128x128xf32>
    %cst_45 = arith.constant dense<0.000000e+00> : vector<8x128xf32>
    %80 = tpu.matmul %5, %79, %cst_45 {dimension_numbers = #tpu.dot_dimension_numbers<[1], [0], [0], [1], [0, 0, 1, 1], [], []>} : vector<8x128xf32>, vector<128x128xf32>, vector<8x128xf32> -> vector<8x128xf32>
    %81 = vector.broadcast %77 : vector<8x1xf32> to vector<8x128xf32>
    %82 = arith.mulf %81, %80 : vector<8x128xf32>
    %83 = arith.addf %76, %82 : vector<8x128xf32>
    %c0_46 = arith.constant 0 : index
    %c0_47 = arith.constant 0 : index
    %84 = vector.load %arg7[%c0_46, %c0_47] : memref<1x128xf32, #tpu.memory_space<vmem>>, vector<1x128xf32>
    %85 = vector.broadcast %84 : vector<1x128xf32> to vector<8x128xf32>
    %86 = arith.addf %83, %85 : vector<8x128xf32>
    %cst_48 = arith.constant 0.000000e+00 : f32
    %87 = vector.broadcast %cst_48 : f32 to vector<8x128xf32>
    %88 = arith.maximumf %86, %87 : vector<8x128xf32>
    %c0_49 = arith.constant 0 : index
    %c0_50 = arith.constant 0 : index
    %89 = vector.load %arg8[%c0_49, %c0_50] : memref<128x128xf32, #tpu.memory_space<vmem>>, vector<128x128xf32>
    %cst_51 = arith.constant dense<0.000000e+00> : vector<8x128xf32>
    %90 = tpu.matmul %88, %89, %cst_51 {dimension_numbers = #tpu.dot_dimension_numbers<[1], [0], [0], [1], [0, 0, 1, 1], [], []>} : vector<8x128xf32>, vector<128x128xf32>, vector<8x128xf32> -> vector<8x128xf32>
    %c0_52 = arith.constant 0 : index
    %c0_53 = arith.constant 0 : index
    %91 = vector.load %arg9[%c0_52, %c0_53] : memref<1x128xf32, #tpu.memory_space<vmem>>, vector<1x128xf32>
    %92 = vector.broadcast %91 : vector<1x128xf32> to vector<8x128xf32>
    %93 = arith.addf %90, %92 : vector<8x128xf32>
    %cst_54 = arith.constant 0.000000e+00 : f32
    %94 = vector.broadcast %cst_54 : f32 to vector<8x128xf32>
    %95 = arith.subf %94, %93 : vector<8x128xf32>
    %96 = math.exp %95 : vector<8x128xf32>
    %cst_55 = arith.constant 1.000000e+00 : f32
    %97 = vector.broadcast %cst_55 : f32 to vector<8x128xf32>
    %98 = arith.addf %97, %96 : vector<8x128xf32>
    %99 = tpu.reciprocal %98 : vector<8x128xf32> -> vector<8x128xf32>
    %c0_56 = arith.constant 0 : index
    %c0_57 = arith.constant 0 : index
    %100 = vector.load %arg12[%c0_56, %c0_57] : memref<8x128xf32, #tpu.memory_space<vmem>>, vector<8x128xf32>
    tpu.vector_store %arg12[%c0_56, %c0_57], %99 {strides = array<i32>} : memref<8x128xf32, #tpu.memory_space<vmem>>, vector<8x128xf32>,
    return
  }
  func.func @transform_0(%arg0: i32) -> (i32, i32) {
    %c0_i32 = arith.constant 0 : i32
    %c0_i32_0 = arith.constant 0 : i32
    return %arg0, %c0_i32 : i32, i32
  }
  func.func @transform_1(%arg0: i32) -> (i32, i32) {
    %c0_i32 = arith.constant 0 : i32
    %c0_i32_0 = arith.constant 0 : i32
    %c0_i32_1 = arith.constant 0 : i32
    return %c0_i32, %c0_i32_0 : i32, i32
  }
  func.func @transform_2(%arg0: i32) -> (i32, i32) {
    %c0_i32 = arith.constant 0 : i32
    %c0_i32_0 = arith.constant 0 : i32
    %c0_i32_1 = arith.constant 0 : i32
    return %c0_i32, %c0_i32_0 : i32, i32
  }
  func.func @transform_3(%arg0: i32) -> (i32, i32) {
    %c0_i32 = arith.constant 0 : i32
    %c0_i32_0 = arith.constant 0 : i32
    %c0_i32_1 = arith.constant 0 : i32
    return %c0_i32, %c0_i32_0 : i32, i32
  }
  func.func @transform_4(%arg0: i32) -> (i32, i32) {
    %c0_i32 = arith.constant 0 : i32
    %c0_i32_0 = arith.constant 0 : i32
    %c0_i32_1 = arith.constant 0 : i32
    return %c0_i32, %c0_i32_0 : i32, i32
  }
  func.func @transform_5(%arg0: i32) -> (i32, i32, i32) {
    %c0_i32 = arith.constant 0 : i32
    %c0_i32_0 = arith.constant 0 : i32
    %c0_i32_1 = arith.constant 0 : i32
    %c0_i32_2 = arith.constant 0 : i32
    return %c0_i32, %c0_i32_0, %c0_i32_1 : i32, i32, i32
  }
  func.func @transform_6(%arg0: i32) -> (i32, i32) {
    %c0_i32 = arith.constant 0 : i32
    %c0_i32_0 = arith.constant 0 : i32
    %c0_i32_1 = arith.constant 0 : i32
    return %c0_i32, %c0_i32_0 : i32, i32
  }
  func.func @transform_7(%arg0: i32) -> (i32, i32) {
    %c0_i32 = arith.constant 0 : i32
    %c0_i32_0 = arith.constant 0 : i32
    %c0_i32_1 = arith.constant 0 : i32
    return %c0_i32, %c0_i32_0 : i32, i32
  }
  func.func @transform_8(%arg0: i32) -> (i32, i32) {
    %c0_i32 = arith.constant 0 : i32
    %c0_i32_0 = arith.constant 0 : i32
    %c0_i32_1 = arith.constant 0 : i32
    return %c0_i32, %c0_i32_0 : i32, i32
  }
  func.func @transform_9(%arg0: i32) -> (i32, i32) {
    %c0_i32 = arith.constant 0 : i32
    %c0_i32_0 = arith.constant 0 : i32
    return %arg0, %c0_i32 : i32, i32
  }
  func.func @transform_10(%arg0: i32) -> (i32, i32) {
    %c0_i32 = arith.constant 0 : i32
    %c0_i32_0 = arith.constant 0 : i32
    return %arg0, %c0_i32 : i32, i32
  }
  func.func @transform_11(%arg0: i32) -> (i32, i32) {
    %c0_i32 = arith.constant 0 : i32
    %c0_i32_0 = arith.constant 0 : i32
    return %arg0, %c0_i32 : i32, i32
  }
}

</mosaic_0001>

<llo_original>
// kernel: gfcd_eval_forward.1
$region0: #{gfcd_eval_forward.1}
  #allocation0 [shape = 'u32[]', space=smem, size = 0x4, offset = 0x4, fixed_abs, tag = 'smem constant byte address 0x4 - core index']
  #allocation1 [shape = 'u32[72,128]{1,0:T(1,128)}', space=vmem, size = 0x9000, scoped, tag = 'internal scratch']
  %s0 = inlined_call_operand.vmem [shape: f32[8,256], index: 0, kind: input, shape index: {}]
  %s1 = inlined_call_operand.hbm [shape: f32[256,128], index: 1, kind: input, shape index: {}]
  %s2 = inlined_call_operand.vmem [shape: f32[1,128], index: 2, kind: input, shape index: {}]
  %s3 = inlined_call_operand.hbm [shape: f32[128,128], index: 3, kind: input, shape index: {}]
  %s4 = inlined_call_operand.vmem [shape: f32[1,128], index: 4, kind: input, shape index: {}]
  %s5 = inlined_call_operand.hbm [shape: f32[10,128,128], index: 5, kind: input, shape index: {}]
  %s6 = inlined_call_operand.vmem [shape: f32[1,128], index: 6, kind: input, shape index: {}]
  %s7 = inlined_call_operand.hbm [shape: f32[128,128], index: 7, kind: input, shape index: {}]
  %s8 = inlined_call_operand.vmem [shape: f32[1,128], index: 8, kind: input, shape index: {}]
  %s9 = inlined_call_operand.hbm [shape: f32[8,128], index: 9, kind: output, shape index: {0}]
  %s10 = inlined_call_operand.hbm [shape: f32[8,128], index: 10, kind: output, shape index: {1}]
  %s11 = inlined_call_operand.vmem [shape: f32[8,128], index: 11, kind: output, shape index: {2}]
  %12 = xla_tuple %s9, %s10, %s11
  %s13 = sld [smem:[#allocation0]]
  $region78: #{gfcd_eval_forward.1} parent=0
    _
  %s15 = ssub.s32 1, %s13
  %s16 = scalar_select 0, %s15, %s13
  $region1: #{gfcd_eval_forward.1} parent=0
    #allocation2 [shape = 'u8[131072]{0}', space=vmem, size = 0x20000, scoped, tag = 'input window, operand 1, single buffered']
    #allocation3 [shape = 's32[1]{0}', space=sflag, size = 0x4, scoped, tag = 'scoped memory for gfcd_eval_forward.1']
    #allocation4 [shape = 's32[1]{0}', space=sflag, size = 0x4, scoped, tag = 'scoped memory for gfcd_eval_forward.1']
    #allocation5 [shape = 'u8[65536]{0}', space=vmem, size = 0x10000, scoped, tag = 'input window, operand 3, single buffered']
    #allocation6 [shape = 's32[1]{0}', space=sflag, size = 0x4, scoped, tag = 'scoped memory for gfcd_eval_forward.1']
    #allocation7 [shape = 'u8[655360]{0}', space=vmem, size = 0xa0000, scoped, tag = 'input window, operand 5, single buffered']
    #allocation8 [shape = 'u8[65536]{0}', space=vmem, size = 0x10000, scoped, tag = 'input window, operand 7, single buffered']
    #allocation9 [shape = 's32[1]{0}', space=sflag, size = 0x4, scoped, tag = 'scoped memory for gfcd_eval_forward.1']
    #allocation10 [shape = 'u8[4096]{0}', space=vmem, size = 0x1000, scoped, tag = 'output window, operand 0, single buffered']
    #allocation11 [shape = 'u8[4096]{0}', space=vmem, size = 0x1000, scoped, tag = 'output window, operand 1, single buffered']
    #allocation12 [shape = 's32[1]{0}', space=sflag, size = 0x4, scoped, tag = 'scoped memory for gfcd_eval_forward.1']
    %17 = vsyncpa [#allocation3], 0
    %18 = vsyncpa [#allocation6], 0
    %19 = vsyncpa [#allocation9], 0
    %20 = vsyncpa [#allocation4], 0
    %21 = vsyncpa [#allocation12], 0
    // Predicated region
    $region2: #{gfcd_eval_forward.1} parent=1 // pred_check
      _
    $region3: #{gfcd_eval_forward.1} parent=1 // pred_check_branch
      %23 = sbr.rel (0) target = $region5
    $region4: #{gfcd_eval_forward.1} parent=1 // pred_region
      _
    $region5: #{gfcd_eval_forward.1} parent=1 // pred_fallthru
      _
    // Predicated region
    $region6: #{gfcd_eval_forward.1} parent=1 // pred_check
      _
    $region7: #{gfcd_eval_forward.1} parent=1 // pred_check_branch
      %25 = sbr.rel (0) target = $region9
    $region8: #{gfcd_eval_forward.1} parent=1 // pred_region
      %27 = vsyncadd [#allocation3], 0
      %s28 = sshll.u32 %s1, 4
      %s29 = int_to_ptr.hbm [resolvable:$true] %s28
      %s30 = sshll.u32 [#allocation2], 4
      %s31 = int_to_ptr.vmem [resolvable:$true] %s30
      %36 = dma.hbm_to_vmem [thread:$0]  %s29, 4096, %s31, [#allocation3], 128, 128, 8
    $region9: #{gfcd_eval_forward.1} parent=1 // pred_fallthru
      _
    // Predicated region
    $region10: #{gfcd_eval_forward.1} parent=1 // pred_check
      _
    $region11: #{gfcd_eval_forward.1} parent=1 // pred_check_branch
      %38 = sbr.rel (0) target = $region13
    $region12: #{gfcd_eval_forward.1} parent=1 // pred_region
      _
    $region13: #{gfcd_eval_forward.1} parent=1 // pred_fallthru
      _
    // Predicated region
    $region14: #{gfcd_eval_forward.1} parent=1 // pred_check
      _
    $region15: #{gfcd_eval_forward.1} parent=1 // pred_check_branch
      %40 = sbr.rel (0) target = $region17
    $region16: #{gfcd_eval_forward.1} parent=1 // pred_region
      %42 = vsyncadd [#allocation6], 0
      %s43 = sshll.u32 %s3, 4
      %s44 = int_to_ptr.hbm [resolvable:$true] %s43
      %s45 = sshll.u32 [#allocation5], 4
      %s46 = int_to_ptr.vmem [resolvable:$true] %s45
      %51 = dma.hbm_to_vmem [thread:$0]  %s44, 2048, %s46, [#allocation6], 128, 128, 8
    $region17: #{gfcd_eval_forward.1} parent=1 // pred_fallthru
      _
    // Predicated region
    $region18: #{gfcd_eval_forward.1} parent=1 // pred_check
      _
    $region19: #{gfcd_eval_forward.1} parent=1 // pred_check_branch
      %53 = sbr.rel (0) target = $region21
    $region20: #{gfcd_eval_forward.1} parent=1 // pred_region
      _
    $region21: #{gfcd_eval_forward.1} parent=1 // pred_fallthru
      _
    // Predicated region
    $region22: #{gfcd_eval_forward.1} parent=1 // pred_check
      _
    $region23: #{gfcd_eval_forward.1} parent=1 // pred_check_branch
      %55 = sbr.rel (0) target = $region25
    $region24: #{gfcd_eval_forward.1} parent=1 // pred_region
      %57 = vsyncadd [#allocation6], 0
      %s58 = sshll.u32 %s5, 4
      %s59 = int_to_ptr.hbm [resolvable:$true] %s58
      %s60 = sshll.u32 [#allocation7], 4
      %s61 = int_to_ptr.vmem [resolvable:$true] %s60
      %66 = dma.hbm_to_vmem [thread:$0]  %s59, 20480, %s61, [#allocation6], 128, 128, 8
    $region25: #{gfcd_eval_forward.1} parent=1 // pred_fallthru
      _
    // Predicated region
    $region26: #{gfcd_eval_forward.1} parent=1 // pred_check
      _
    $region27: #{gfcd_eval_forward.1} parent=1 // pred_check_branch
      %68 = sbr.rel (0) target = $region29
    $region28: #{gfcd_eval_forward.1} parent=1 // pred_region
      _
    $region29: #{gfcd_eval_forward.1} parent=1 // pred_fallthru
      _
    // Predicated region
    $region30: #{gfcd_eval_forward.1} parent=1 // pred_check
      _
    $region31: #{gfcd_eval_forward.1} parent=1 // pred_check_branch
      %70 = sbr.rel (0) target = $region33
    $region32: #{gfcd_eval_forward.1} parent=1 // pred_region
      %72 = vsyncadd [#allocation9], 0
      %s73 = sshll.u32 %s7, 4
      %s74 = int_to_ptr.hbm [resolvable:$true] %s73
      %s75 = sshll.u32 [#allocation8], 4
      %s76 = int_to_ptr.vmem [resolvable:$true] %s75
      %81 = dma.hbm_to_vmem [thread:$0]  %s74, 2048, %s76, [#allocation9], 128, 128, 8
    $region33: #{gfcd_eval_forward.1} parent=1 // pred_fallthru
      _
    // Predicated region
    $region34: #{gfcd_eval_forward.1} parent=1 // pred_check
      _
    $region35: #{gfcd_eval_forward.1} parent=1 // pred_check_branch
      %83 = sbr.rel (0) target = $region37
    $region36: #{gfcd_eval_forward.1} parent=1 // pred_region
      _
    $region37: #{gfcd_eval_forward.1} parent=1 // pred_fallthru
      _
    // Predicated region
    $region38: #{gfcd_eval_forward.1} parent=1 // pred_check
      _
    $region39: #{gfcd_eval_forward.1} parent=1 // pred_check_branch
      %85 = sbr.rel (0) target = $region41
    $region40: #{gfcd_eval_forward.1} parent=1 // pred_region
      %87 = dma.done [#allocation3], 4096
    $region41: #{gfcd_eval_forward.1} parent=1 // pred_fallthru
      _
    // Predicated region
    $region42: #{gfcd_eval_forward.1} parent=1 // pred_check
      _
    $region43: #{gfcd_eval_forward.1} parent=1 // pred_check_branch
      %89 = sbr.rel (0) target = $region45
    $region44: #{gfcd_eval_forward.1} parent=1 // pred_region
      %91 = dma.done [#allocation6], 2048
    $region45: #{gfcd_eval_forward.1} parent=1 // pred_fallthru
      _
    // Predicated region
    $region46: #{gfcd_eval_forward.1} parent=1 // pred_check
      _
    $region47: #{gfcd_eval_forward.1} parent=1 // pred_check_branch
      %93 = sbr.rel (0) target = $region49
    $region48: #{gfcd_eval_forward.1} parent=1 // pred_region
      %95 = dma.done [#allocation6], 20480
    $region49: #{gfcd_eval_forward.1} parent=1 // pred_fallthru
      _
    // Predicated region
    $region50: #{gfcd_eval_forward.1} parent=1 // pred_check
      _
    $region51: #{gfcd_eval_forward.1} parent=1 // pred_check_branch
      %97 = sbr.rel (0) target = $region53
    $region52: #{gfcd_eval_forward.1} parent=1 // pred_region
      %99 = dma.done [#allocation9], 2048
    $region53: #{gfcd_eval_forward.1} parent=1 // pred_fallthru
      _
    %v100 = vld [vmem:[%s0] sm:$0xff]
    %v101 = vld [vmem:[%s0 + $0x8] sm:$0xff]
    %v102 = vld [vmem:[#allocation2] sm:$0xff]
    %v103 = vld [vmem:[#allocation2 + $0x8] sm:$0xff]
    %v104 = vld [vmem:[#allocation2 + $0x10] sm:$0xff]
    %v105 = vld [vmem:[#allocation2 + $0x18] sm:$0xff]
    %v106 = vld [vmem:[#allocation2 + $0x20] sm:$0xff]
    %v107 = vld [vmem:[#allocation2 + $0x28] sm:$0xff]
    %v108 = vld [vmem:[#allocation2 + $0x30] sm:$0xff]
    %v109 = vld [vmem:[#allocation2 + $0x38] sm:$0xff]
    %v110 = vld [vmem:[#allocation2 + $0x40] sm:$0xff]
    %v111 = vld [vmem:[#allocation2 + $0x48] sm:$0xff]
    %v112 = vld [vmem:[#allocation2 + $0x50] sm:$0xff]
    %v113 = vld [vmem:[#allocation2 + $0x58] sm:$0xff]
    %v114 = vld [vmem:[#allocation2 + $0x60] sm:$0xff]
    %v115 = vld [vmem:[#allocation2 + $0x68] sm:$0xff]
    %v116 = vld [vmem:[#allocation2 + $0x70] sm:$0xff]
    %v117 = vld [vmem:[#allocation2 + $0x78] sm:$0xff]
    %v118 = vld [vmem:[#allocation2 + $0x80] sm:$0xff]
    %v119 = vld [vmem:[#allocation2 + $0x88] sm:$0xff]
    %v120 = vld [vmem:[#allocation2 + $0x90] sm:$0xff]
    %v121 = vld [vmem:[#allocation2 + $0x98] sm:$0xff]
    %v122 = vld [vmem:[#allocation2 + $0xa0] sm:$0xff]
    %v123 = vld [vmem:[#allocation2 + $0xa8] sm:$0xff]
    %v124 = vld [vmem:[#allocation2 + $0xb0] sm:$0xff]
    %v125 = vld [vmem:[#allocation2 + $0xb8] sm:$0xff]
    %v126 = vld [vmem:[#allocation2 + $0xc0] sm:$0xff]
    %v127 = vld [vmem:[#allocation2 + $0xc8] sm:$0xff]
    %v128 = vld [vmem:[#allocation2 + $0xd0] sm:$0xff]
    %v129 = vld [vmem:[#allocation2 + $0xd8] sm:$0xff]
    %v130 = vld [vmem:[#allocation2 + $0xe0] sm:$0xff]
    %v131 = vld [vmem:[#allocation2 + $0xe8] sm:$0xff]
    %v132 = vld [vmem:[#allocation2 + $0xf0] sm:$0xff]
    %v133 = vld [vmem:[#allocation2 + $0xf8] sm:$0xff]
    %v134 = vld [vmem:[%s2] sm:$0x1]
    %v136 = vperm.slane %v134, 0
    %138 = vmatpush.msra.mxu0 %v117
    %139 = vmatpush.msra.mxu0 %v116
    %140 = vmatpush.msra.mxu0 %v115
    %141 = vmatpush.msra.mxu0 %v114
    %142 = vmatpush.msra.mxu0 %v113
    %143 = vmatpush.msra.mxu0 %v112
    %144 = vmatpush.msra.mxu0 %v111
    %145 = vmatpush.msra.mxu0 %v110
    %146 = vmatpush.msra.mxu0 %v109
    %147 = vmatpush.msra.mxu0 %v108
    %148 = vmatpush.msra.mxu0 %v107
    %149 = vmatpush.msra.mxu0 %v106
    %150 = vmatpush.msra.mxu0 %v105
    %151 = vmatpush.msra.mxu0 %v104
    %152 = vmatpush.msra.mxu0 %v103
    %153 = vmatpush.msra.mxu0 %v102
    %154 = vmatmul.f32.gmra.mxu0 %v100
    %v155 = vpop.f32.mrf.mxu0
    %v156 = vadd.f32 %v136, %v155
    %157 = vdwg.mxu0
    %158 = vmatpush.msra.mxu0 %v133
    %159 = vmatpush.msra.mxu0 %v132
    %160 = vmatpush.msra.mxu0 %v131
    %161 = vmatpush.msra.mxu0 %v130
    %162 = vmatpush.msra.mxu0 %v129
    %163 = vmatpush.msra.mxu0 %v128
    %164 = vmatpush.msra.mxu0 %v127
    %165 = vmatpush.msra.mxu0 %v126
    %166 = vmatpush.msra.mxu0 %v125
    %167 = vmatpush.msra.mxu0 %v124
    %168 = vmatpush.msra.mxu0 %v123
    %169 = vmatpush.msra.mxu0 %v122
    %170 = vmatpush.msra.mxu0 %v121
    %171 = vmatpush.msra.mxu0 %v120
    %172 = vmatpush.msra.mxu0 %v119
    %173 = vmatpush.msra.mxu0 %v118
    %174 = vmatmul.f32.gmra.mxu0 %v101
    %v175 = vpop.f32.mrf.mxu0
    %v176 = vadd.f32 %v156, %v175
    %177 = vdwg.mxu0
    %v178 = vld [vmem:[#allocation5] sm:$0xff]
    %v179 = vld [vmem:[#allocation5 + $0x8] sm:$0xff]
    %v180 = vld [vmem:[#allocation5 + $0x10] sm:$0xff]
    %v181 = vld [vmem:[#allocation5 + $0x18] sm:$0xff]
    %v182 = vld [vmem:[#allocation5 + $0x20] sm:$0xff]
    %v183 = vld [vmem:[#allocation5 + $0x28] sm:$0xff]
    %v184 = vld [vmem:[#allocation5 + $0x30] sm:$0xff]
    %v185 = vld [vmem:[#allocation5 + $0x38] sm:$0xff]
    %v186 = vld [vmem:[#allocation5 + $0x40] sm:$0xff]
    %v187 = vld [vmem:[#allocation5 + $0x48] sm:$0xff]
    %v188 = vld [vmem:[#allocation5 + $0x50] sm:$0xff]
    %v189 = vld [vmem:[#allocation5 + $0x58] sm:$0xff]
    %v190 = vld [vmem:[#allocation5 + $0x60] sm:$0xff]
    %v191 = vld [vmem:[#allocation5 + $0x68] sm:$0xff]
    %v192 = vld [vmem:[#allocation5 + $0x70] sm:$0xff]
    %v193 = vld [vmem:[#allocation5 + $0x78] sm:$0xff]
    %v194 = vld [vmem:[%s4] sm:$0x1]
    %v196 = vperm.slane %v194, 0
    %198 = vmatpush.msra.mxu0 %v193
    %199 = vmatpush.msra.mxu0 %v192
    %200 = vmatpush.msra.mxu0 %v191
    %201 = vmatpush.msra.mxu0 %v190
    %202 = vmatpush.msra.mxu0 %v189
    %203 = vmatpush.msra.mxu0 %v188
    %204 = vmatpush.msra.mxu0 %v187
    %205 = vmatpush.msra.mxu0 %v186
    %206 = vmatpush.msra.mxu0 %v185
    %207 = vmatpush.msra.mxu0 %v184
    %208 = vmatpush.msra.mxu0 %v183
    %209 = vmatpush.msra.mxu0 %v182
    %210 = vmatpush.msra.mxu0 %v181
    %211 = vmatpush.msra.mxu0 %v180
    %212 = vmatpush.msra.mxu0 %v179
    %213 = vmatpush.msra.mxu0 %v178
    %214 = vmatmul.f32.gmra.mxu0 %v176
    %v215 = vpop.f32.mrf.mxu0
    %v216 = vadd.f32 %v196, %v215
    %217 = vdwg.mxu0
    %218 = vst [vmem:[#allocation10] sm:$0xff] %v176
    %219 = vst [vmem:[#allocation11] sm:$0xff] %v216
    %v220 = vld [vmem:[#allocation7] sm:$0xff]
    %v221 = vld [vmem:[#allocation7 + $0x8] sm:$0xff]
    %v222 = vld [vmem:[#allocation7 + $0x10] sm:$0xff]
    %v223 = vld [vmem:[#allocation7 + $0x18] sm:$0xff]
    %v224 = vld [vmem:[#allocation7 + $0x20] sm:$0xff]
    %v225 = vld [vmem:[#allocation7 + $0x28] sm:$0xff]
    %v226 = vld [vmem:[#allocation7 + $0x30] sm:$0xff]
    %v227 = vld [vmem:[#allocation7 + $0x38] sm:$0xff]
    %v228 = vld [vmem:[#allocation7 + $0x40] sm:$0xff]
    %v229 = vld [vmem:[#allocation7 + $0x48] sm:$0xff]
    %v230 = vld [vmem:[#allocation7 + $0x50] sm:$0xff]
    %v231 = vld [vmem:[#allocation7 + $0x58] sm:$0xff]
    %v232 = vld [vmem:[#allocation7 + $0x60] sm:$0xff]
    %v233 = vld [vmem:[#allocation7 + $0x68] sm:$0xff]
    %v234 = vld [vmem:[#allocation7 + $0x70] sm:$0xff]
    %v235 = vld [vmem:[#allocation7 + $0x78] sm:$0xff]
    %236 = vmatpush.msra.mxu0 %v235
    %237 = vmatpush.msra.mxu0 %v234
    %238 = vmatpush.msra.mxu0 %v233
    %239 = vmatpush.msra.mxu0 %v232
    %240 = vmatpush.msra.mxu0 %v231
    %241 = vmatpush.msra.mxu0 %v230
    %242 = vmatpush.msra.mxu0 %v229
    %243 = vmatpush.msra.mxu0 %v228
    %244 = vmatpush.msra.mxu0 %v227
    %245 = vmatpush.msra.mxu0 %v226
    %246 = vmatpush.msra.mxu0 %v225
    %247 = vmatpush.msra.mxu0 %v224
    %248 = vmatpush.msra.mxu0 %v223
    %249 = vmatpush.msra.mxu0 %v222
    %250 = vmatpush.msra.mxu0 %v221
    %251 = vmatpush.msra.mxu0 %v220
    %252 = vmatmul.f32.gmra.mxu0 %v176
    %v253 = vpop.f32.mrf.mxu0
    %v254 = vadd.f32 0.0, %v253
    %255 = vdwg.mxu0
    %257 = vset.pattern.permute.xlu0 0
    %258 = vperm.xlu0 %257, %v216
    %v259 = vpop.permute.xlu0 %258
    %v261 = vmul.f32 %v259, %v254
    %v262 = vadd.f32 %v261, 0.0
    %s263 = scalar_lea.vmem [#allocation7], 128
    %v264 = vld [vmem:[%s263] sm:$0xff]
    %v265 = vld [vmem:[%s263 + $0x8] sm:$0xff]
    %v266 = vld [vmem:[%s263 + $0x10] sm:$0xff]
    %v267 = vld [vmem:[%s263 + $0x18] sm:$0xff]
    %v268 = vld [vmem:[%s263 + $0x20] sm:$0xff]
    %v269 = vld [vmem:[%s263 + $0x28] sm:$0xff]
    %v270 = vld [vmem:[%s263 + $0x30] sm:$0xff]
    %v271 = vld [vmem:[%s263 + $0x38] sm:$0xff]
    %v272 = vld [vmem:[%s263 + $0x40] sm:$0xff]
    %v273 = vld [vmem:[%s263 + $0x48] sm:$0xff]
    %v274 = vld [vmem:[%s263 + $0x50] sm:$0xff]
    %v275 = vld [vmem:[%s263 + $0x58] sm:$0xff]
    %v276 = vld [vmem:[%s263 + $0x60] sm:$0xff]
    %v277 = vld [vmem:[%s263 + $0x68] sm:$0xff]
    %v278 = vld [vmem:[%s263 + $0x70] sm:$0xff]
    %v279 = vld [vmem:[%s263 + $0x78] sm:$0xff]
    %280 = vmatpush.msra.mxu0 %v279
    %281 = vmatpush.msra.mxu0 %v278
    %282 = vmatpush.msra.mxu0 %v277
    %283 = vmatpush.msra.mxu0 %v276
    %284 = vmatpush.msra.mxu0 %v275
    %285 = vmatpush.msra.mxu0 %v274
    %286 = vmatpush.msra.mxu0 %v273
    %287 = vmatpush.msra.mxu0 %v272
    %288 = vmatpush.msra.mxu0 %v271
    %289 = vmatpush.msra.mxu0 %v270
    %290 = vmatpush.msra.mxu0 %v269
    %291 = vmatpush.msra.mxu0 %v268
    %292 = vmatpush.msra.mxu0 %v267
    %293 = vmatpush.msra.mxu0 %v266
    %294 = vmatpush.msra.mxu0 %v265
    %295 = vmatpush.msra.mxu0 %v264
    %296 = vmatmul.f32.gmra.mxu0 %v176
    %v297 = vpop.f32.mrf.mxu0
    %v298 = vadd.f32 0.0, %v297
    %299 = vdwg.mxu0
    %300 = vset.pattern.permute.xlu0 1
    %301 = vperm.xlu0 %300, %v216
    %v302 = vpop.permute.xlu0 %301
    %v304 = vmul.f32 %v302, %v298
    %v305 = vadd.f32 %v262, %v304
    %s306 = scalar_lea.vmem [#allocation7], 256
    %v307 = vld [vmem:[%s306] sm:$0xff]
    %v308 = vld [vmem:[%s306 + $0x8] sm:$0xff]
    %v309 = vld [vmem:[%s306 + $0x10] sm:$0xff]
    %v310 = vld [vmem:[%s306 + $0x18] sm:$0xff]
    %v311 = vld [vmem:[%s306 + $0x20] sm:$0xff]
    %v312 = vld [vmem:[%s306 + $0x28] sm:$0xff]
    %v313 = vld [vmem:[%s306 + $0x30] sm:$0xff]
    %v314 = vld [vmem:[%s306 + $0x38] sm:$0xff]
    %v315 = vld [vmem:[%s306 + $0x40] sm:$0xff]
    %v316 = vld [vmem:[%s306 + $0x48] sm:$0xff]
    %v317 = vld [vmem:[%s306 + $0x50] sm:$0xff]
    %v318 = vld [vmem:[%s306 + $0x58] sm:$0xff]
    %v319 = vld [vmem:[%s306 + $0x60] sm:$0xff]
    %v320 = vld [vmem:[%s306 + $0x68] sm:$0xff]
    %v321 = vld [vmem:[%s306 + $0x70] sm:$0xff]
    %v322 = vld [vmem:[%s306 + $0x78] sm:$0xff]
    %323 = vmatpush.msra.mxu0 %v322
    %324 = vmatpush.msra.mxu0 %v321
    %325 = vmatpush.msra.mxu0 %v320
    %326 = vmatpush.msra.mxu0 %v319
    %327 = vmatpush.msra.mxu0 %v318
    %328 = vmatpush.msra.mxu0 %v317
    %329 = vmatpush.msra.mxu0 %v316
    %330 = vmatpush.msra.mxu0 %v315
    %331 = vmatpush.msra.mxu0 %v314
    %332 = vmatpush.msra.mxu0 %v313
    %333 = vmatpush.msra.mxu0 %v312
    %334 = vmatpush.msra.mxu0 %v311
    %335 = vmatpush.msra.mxu0 %v310
    %336 = vmatpush.msra.mxu0 %v309
    %337 = vmatpush.msra.mxu0 %v308
    %338 = vmatpush.msra.mxu0 %v307
    %339 = vmatmul.f32.gmra.mxu0 %v176
    %v340 = vpop.f32.mrf.mxu0
    %v341 = vadd.f32 0.0, %v340
    %342 = vdwg.mxu0
    %343 = vset.pattern.permute.xlu0 2
    %344 = vperm.xlu0 %343, %v216
    %v345 = vpop.permute.xlu0 %344
    %v347 = vmul.f32 %v345, %v341
    %v348 = vadd.f32 %v305, %v347
    %s349 = scalar_lea.vmem [#allocation7], 384
    %v350 = vld [vmem:[%s349] sm:$0xff]
    %v351 = vld [vmem:[%s349 + $0x8] sm:$0xff]
    %v352 = vld [vmem:[%s349 + $0x10] sm:$0xff]
    %v353 = vld [vmem:[%s349 + $0x18] sm:$0xff]
    %v354 = vld [vmem:[%s349 + $0x20] sm:$0xff]
    %v355 = vld [vmem:[%s349 + $0x28] sm:$0xff]
    %v356 = vld [vmem:[%s349 + $0x30] sm:$0xff]
    %v357 = vld [vmem:[%s349 + $0x38] sm:$0xff]
    %v358 = vld [vmem:[%s349 + $0x40] sm:$0xff]
    %v359 = vld [vmem:[%s349 + $0x48] sm:$0xff]
    %v360 = vld [vmem:[%s349 + $0x50] sm:$0xff]
    %v361 = vld [vmem:[%s349 + $0x58] sm:$0xff]
    %v362 = vld [vmem:[%s349 + $0x60] sm:$0xff]
    %v363 = vld [vmem:[%s349 + $0x68] sm:$0xff]
    %v364 = vld [vmem:[%s349 + $0x70] sm:$0xff]
    %v365 = vld [vmem:[%s349 + $0x78] sm:$0xff]
    %366 = vmatpush.msra.mxu0 %v365
    %367 = vmatpush.msra.mxu0 %v364
    %368 = vmatpush.msra.mxu0 %v363
    %369 = vmatpush.msra.mxu0 %v362
    %370 = vmatpush.msra.mxu0 %v361
    %371 = vmatpush.msra.mxu0 %v360
    %372 = vmatpush.msra.mxu0 %v359
    %373 = vmatpush.msra.mxu0 %v358
    %374 = vmatpush.msra.mxu0 %v357
    %375 = vmatpush.msra.mxu0 %v356
    %376 = vmatpush.msra.mxu0 %v355
    %377 = vmatpush.msra.mxu0 %v354
    %378 = vmatpush.msra.mxu0 %v353
    %379 = vmatpush.msra.mxu0 %v352
    %380 = vmatpush.msra.mxu0 %v351
    %381 = vmatpush.msra.mxu0 %v350
    %382 = vmatmul.f32.gmra.mxu0 %v176
    %v383 = vpop.f32.mrf.mxu0
    %v384 = vadd.f32 0.0, %v383
    %385 = vdwg.mxu0
    %386 = vset.pattern.permute.xlu0 3
    %387 = vperm.xlu0 %386, %v216
    %v388 = vpop.permute.xlu0 %387
    %v390 = vmul.f32 %v388, %v384
    %v391 = vadd.f32 %v348, %v390
    %s392 = scalar_lea.vmem [#allocation7], 512
    %v393 = vld [vmem:[%s392] sm:$0xff]
    %v394 = vld [vmem:[%s392 + $0x8] sm:$0xff]
    %v395 = vld [vmem:[%s392 + $0x10] sm:$0xff]
    %v396 = vld [vmem:[%s392 + $0x18] sm:$0xff]
    %v397 = vld [vmem:[%s392 + $0x20] sm:$0xff]
    %v398 = vld [vmem:[%s392 + $0x28] sm:$0xff]
    %v399 = vld [vmem:[%s392 + $0x30] sm:$0xff]
    %v400 = vld [vmem:[%s392 + $0x38] sm:$0xff]
    %v401 = vld [vmem:[%s392 + $0x40] sm:$0xff]
    %v402 = vld [vmem:[%s392 + $0x48] sm:$0xff]
    %v403 = vld [vmem:[%s392 + $0x50] sm:$0xff]
    %v404 = vld [vmem:[%s392 + $0x58] sm:$0xff]
    %v405 = vld [vmem:[%s392 + $0x60] sm:$0xff]
    %v406 = vld [vmem:[%s392 + $0x68] sm:$0xff]
    %v407 = vld [vmem:[%s392 + $0x70] sm:$0xff]
    %v408 = vld [vmem:[%s392 + $0x78] sm:$0xff]
    %409 = vmatpush.msra.mxu0 %v408
    %410 = vmatpush.msra.mxu0 %v407
    %411 = vmatpush.msra.mxu0 %v406
    %412 = vmatpush.msra.mxu0 %v405
    %413 = vmatpush.msra.mxu0 %v404
    %414 = vmatpush.msra.mxu0 %v403
    %415 = vmatpush.msra.mxu0 %v402
    %416 = vmatpush.msra.mxu0 %v401
    %417 = vmatpush.msra.mxu0 %v400
    %418 = vmatpush.msra.mxu0 %v399
    %419 = vmatpush.msra.mxu0 %v398
    %420 = vmatpush.msra.mxu0 %v397
    %421 = vmatpush.msra.mxu0 %v396
    %422 = vmatpush.msra.mxu0 %v395
    %423 = vmatpush.msra.mxu0 %v394
    %424 = vmatpush.msra.mxu0 %v393
    %425 = vmatmul.f32.gmra.mxu0 %v176
    %v426 = vpop.f32.mrf.mxu0
    %v427 = vadd.f32 0.0, %v426
    %428 = vdwg.mxu0
    %429 = vset.pattern.permute.xlu0 4
    %430 = vperm.xlu0 %429, %v216
    %v431 = vpop.permute.xlu0 %430
    %v433 = vmul.f32 %v431, %v427
    %v434 = vadd.f32 %v391, %v433
    %s435 = scalar_lea.vmem [#allocation7], 640
    %v436 = vld [vmem:[%s435] sm:$0xff]
    %v437 = vld [vmem:[%s435 + $0x8] sm:$0xff]
    %v438 = vld [vmem:[%s435 + $0x10] sm:$0xff]
    %v439 = vld [vmem:[%s435 + $0x18] sm:$0xff]
    %v440 = vld [vmem:[%s435 + $0x20] sm:$0xff]
    %v441 = vld [vmem:[%s435 + $0x28] sm:$0xff]
    %v442 = vld [vmem:[%s435 + $0x30] sm:$0xff]
    %v443 = vld [vmem:[%s435 + $0x38] sm:$0xff]
    %v444 = vld [vmem:[%s435 + $0x40] sm:$0xff]
    %v445 = vld [vmem:[%s435 + $0x48] sm:$0xff]
    %v446 = vld [vmem:[%s435 + $0x50] sm:$0xff]
    %v447 = vld [vmem:[%s435 + $0x58] sm:$0xff]
    %v448 = vld [vmem:[%s435 + $0x60] sm:$0xff]
    %v449 = vld [vmem:[%s435 + $0x68] sm:$0xff]
    %v450 = vld [vmem:[%s435 + $0x70] sm:$0xff]
    %v451 = vld [vmem:[%s435 + $0x78] sm:$0xff]
    %452 = vmatpush.msra.mxu0 %v451
    %453 = vmatpush.msra.mxu0 %v450
    %454 = vmatpush.msra.mxu0 %v449
    %455 = vmatpush.msra.mxu0 %v448
    %456 = vmatpush.msra.mxu0 %v447
    %457 = vmatpush.msra.mxu0 %v446
    %458 = vmatpush.msra.mxu0 %v445
    %459 = vmatpush.msra.mxu0 %v444
    %460 = vmatpush.msra.mxu0 %v443
    %461 = vmatpush.msra.mxu0 %v442
    %462 = vmatpush.msra.mxu0 %v441
    %463 = vmatpush.msra.mxu0 %v440
    %464 = vmatpush.msra.mxu0 %v439
    %465 = vmatpush.msra.mxu0 %v438
    %466 = vmatpush.msra.mxu0 %v437
    %467 = vmatpush.msra.mxu0 %v436
    %468 = vmatmul.f32.gmra.mxu0 %v176
    %v469 = vpop.f32.mrf.mxu0
    %v470 = vadd.f32 0.0, %v469
    %471 = vdwg.mxu0
    %472 = vset.pattern.permute.xlu0 5
    %473 = vperm.xlu0 %472, %v216
    %v474 = vpop.permute.xlu0 %473
    %v476 = vmul.f32 %v474, %v470
    %v477 = vadd.f32 %v434, %v476
    %s478 = scalar_lea.vmem [#allocation7], 768
    %v479 = vld [vmem:[%s478] sm:$0xff]
    %v480 = vld [vmem:[%s478 + $0x8] sm:$0xff]
    %v481 = vld [vmem:[%s478 + $0x10] sm:$0xff]
    %v482 = vld [vmem:[%s478 + $0x18] sm:$0xff]
    %v483 = vld [vmem:[%s478 + $0x20] sm:$0xff]
    %v484 = vld [vmem:[%s478 + $0x28] sm:$0xff]
    %v485 = vld [vmem:[%s478 + $0x30] sm:$0xff]
    %v486 = vld [vmem:[%s478 + $0x38] sm:$0xff]
    %v487 = vld [vmem:[%s478 + $0x40] sm:$0xff]
    %v488 = vld [vmem:[%s478 + $0x48] sm:$0xff]
    %v489 = vld [vmem:[%s478 + $0x50] sm:$0xff]
    %v490 = vld [vmem:[%s478 + $0x58] sm:$0xff]
    %v491 = vld [vmem:[%s478 + $0x60] sm:$0xff]
    %v492 = vld [vmem:[%s478 + $0x68] sm:$0xff]
    %v493 = vld [vmem:[%s478 + $0x70] sm:$0xff]
    %v494 = vld [vmem:[%s478 + $0x78] sm:$0xff]
    %495 = vmatpush.msra.mxu0 %v494
    %496 = vmatpush.msra.mxu0 %v493
    %497 = vmatpush.msra.mxu0 %v492
    %498 = vmatpush.msra.mxu0 %v491
    %499 = vmatpush.msra.mxu0 %v490
    %500 = vmatpush.msra.mxu0 %v489
    %501 = vmatpush.msra.mxu0 %v488
    %502 = vmatpush.msra.mxu0 %v487
    %503 = vmatpush.msra.mxu0 %v486
    %504 = vmatpush.msra.mxu0 %v485
    %505 = vmatpush.msra.mxu0 %v484
    %506 = vmatpush.msra.mxu0 %v483
    %507 = vmatpush.msra.mxu0 %v482
    %508 = vmatpush.msra.mxu0 %v481
    %509 = vmatpush.msra.mxu0 %v480
    %510 = vmatpush.msra.mxu0 %v479
    %511 = vmatmul.f32.gmra.mxu0 %v176
    %v512 = vpop.f32.mrf.mxu0
    %v513 = vadd.f32 0.0, %v512
    %514 = vdwg.mxu0
    %515 = vset.pattern.permute.xlu0 6
    %516 = vperm.xlu0 %515, %v216
    %v517 = vpop.permute.xlu0 %516
    %v519 = vmul.f32 %v517, %v513
    %v520 = vadd.f32 %v477, %v519
    %s521 = scalar_lea.vmem [#allocation7], 896
    %v522 = vld [vmem:[%s521] sm:$0xff]
    %v523 = vld [vmem:[%s521 + $0x8] sm:$0xff]
    %v524 = vld [vmem:[%s521 + $0x10] sm:$0xff]
    %v525 = vld [vmem:[%s521 + $0x18] sm:$0xff]
    %v526 = vld [vmem:[%s521 + $0x20] sm:$0xff]
    %v527 = vld [vmem:[%s521 + $0x28] sm:$0xff]
    %v528 = vld [vmem:[%s521 + $0x30] sm:$0xff]
    %v529 = vld [vmem:[%s521 + $0x38] sm:$0xff]
    %v530 = vld [vmem:[%s521 + $0x40] sm:$0xff]
    %v531 = vld [vmem:[%s521 + $0x48] sm:$0xff]
    %v532 = vld [vmem:[%s521 + $0x50] sm:$0xff]
    %v533 = vld [vmem:[%s521 + $0x58] sm:$0xff]
    %v534 = vld [vmem:[%s521 + $0x60] sm:$0xff]
    %v535 = vld [vmem:[%s521 + $0x68] sm:$0xff]
    %v536 = vld [vmem:[%s521 + $0x70] sm:$0xff]
    %v537 = vld [vmem:[%s521 + $0x78] sm:$0xff]
    %538 = vmatpush.msra.mxu0 %v537
    %539 = vmatpush.msra.mxu0 %v536
    %540 = vmatpush.msra.mxu0 %v535
    %541 = vmatpush.msra.mxu0 %v534
    %542 = vmatpush.msra.mxu0 %v533
    %543 = vmatpush.msra.mxu0 %v532
    %544 = vmatpush.msra.mxu0 %v531
    %545 = vmatpush.msra.mxu0 %v530
    %546 = vmatpush.msra.mxu0 %v529
    %547 = vmatpush.msra.mxu0 %v528
    %548 = vmatpush.msra.mxu0 %v527
    %549 = vmatpush.msra.mxu0 %v526
    %550 = vmatpush.msra.mxu0 %v525
    %551 = vmatpush.msra.mxu0 %v524
    %552 = vmatpush.msra.mxu0 %v523
    %553 = vmatpush.msra.mxu0 %v522
    %554 = vmatmul.f32.gmra.mxu0 %v176
    %v555 = vpop.f32.mrf.mxu0
    %v556 = vadd.f32 0.0, %v555
    %557 = vdwg.mxu0
    %558 = vset.pattern.permute.xlu0 7
    %559 = vperm.xlu0 %558, %v216
    %v560 = vpop.permute.xlu0 %559
    %v562 = vmul.f32 %v560, %v556
    %v563 = vadd.f32 %v520, %v562
    %s564 = scalar_lea.vmem [#allocation7], 1024
    %v565 = vld [vmem:[%s564] sm:$0xff]
    %v566 = vld [vmem:[%s564 + $0x8] sm:$0xff]
    %v567 = vld [vmem:[%s564 + $0x10] sm:$0xff]
    %v568 = vld [vmem:[%s564 + $0x18] sm:$0xff]
    %v569 = vld [vmem:[%s564 + $0x20] sm:$0xff]
    %v570 = vld [vmem:[%s564 + $0x28] sm:$0xff]
    %v571 = vld [vmem:[%s564 + $0x30] sm:$0xff]
    %v572 = vld [vmem:[%s564 + $0x38] sm:$0xff]
    %v573 = vld [vmem:[%s564 + $0x40] sm:$0xff]
    %v574 = vld [vmem:[%s564 + $0x48] sm:$0xff]
    %v575 = vld [vmem:[%s564 + $0x50] sm:$0xff]
    %v576 = vld [vmem:[%s564 + $0x58] sm:$0xff]
    %v577 = vld [vmem:[%s564 + $0x60] sm:$0xff]
    %v578 = vld [vmem:[%s564 + $0x68] sm:$0xff]
    %v579 = vld [vmem:[%s564 + $0x70] sm:$0xff]
    %v580 = vld [vmem:[%s564 + $0x78] sm:$0xff]
    %581 = vmatpush.msra.mxu0 %v580
    %582 = vmatpush.msra.mxu0 %v579
    %583 = vmatpush.msra.mxu0 %v578
    %584 = vmatpush.msra.mxu0 %v577
    %585 = vmatpush.msra.mxu0 %v576
    %586 = vmatpush.msra.mxu0 %v575
    %587 = vmatpush.msra.mxu0 %v574
    %588 = vmatpush.msra.mxu0 %v573
    %589 = vmatpush.msra.mxu0 %v572
    %590 = vmatpush.msra.mxu0 %v571
    %591 = vmatpush.msra.mxu0 %v570
    %592 = vmatpush.msra.mxu0 %v569
    %593 = vmatpush.msra.mxu0 %v568
    %594 = vmatpush.msra.mxu0 %v567
    %595 = vmatpush.msra.mxu0 %v566
    %596 = vmatpush.msra.mxu0 %v565
    %597 = vmatmul.f32.gmra.mxu0 %v176
    %v598 = vpop.f32.mrf.mxu0
    %v599 = vadd.f32 0.0, %v598
    %600 = vdwg.mxu0
    %601 = vset.pattern.permute.xlu0 8
    %602 = vperm.xlu0 %601, %v216
    %v603 = vpop.permute.xlu0 %602
    %v605 = vmul.f32 %v603, %v599
    %v606 = vadd.f32 %v563, %v605
    %s607 = scalar_lea.vmem [#allocation7], 1152
    %v608 = vld [vmem:[%s607] sm:$0xff]
    %v609 = vld [vmem:[%s607 + $0x8] sm:$0xff]
    %v610 = vld [vmem:[%s607 + $0x10] sm:$0xff]
    %v611 = vld [vmem:[%s607 + $0x18] sm:$0xff]
    %v612 = vld [vmem:[%s607 + $0x20] sm:$0xff]
    %v613 = vld [vmem:[%s607 + $0x28] sm:$0xff]
    %v614 = vld [vmem:[%s607 + $0x30] sm:$0xff]
    %v615 = vld [vmem:[%s607 + $0x38] sm:$0xff]
    %v616 = vld [vmem:[%s607 + $0x40] sm:$0xff]
    %v617 = vld [vmem:[%s607 + $0x48] sm:$0xff]
    %v618 = vld [vmem:[%s607 + $0x50] sm:$0xff]
    %v619 = vld [vmem:[%s607 + $0x58] sm:$0xff]
    %v620 = vld [vmem:[%s607 + $0x60] sm:$0xff]
    %v621 = vld [vmem:[%s607 + $0x68] sm:$0xff]
    %v622 = vld [vmem:[%s607 + $0x70] sm:$0xff]
    %v623 = vld [vmem:[%s607 + $0x78] sm:$0xff]
    %624 = vmatpush.msra.mxu0 %v623
    %625 = vmatpush.msra.mxu0 %v622
    %626 = vmatpush.msra.mxu0 %v621
    %627 = vmatpush.msra.mxu0 %v620
    %628 = vmatpush.msra.mxu0 %v619
    %629 = vmatpush.msra.mxu0 %v618
    %630 = vmatpush.msra.mxu0 %v617
    %631 = vmatpush.msra.mxu0 %v616
    %632 = vmatpush.msra.mxu0 %v615
    %633 = vmatpush.msra.mxu0 %v614
    %634 = vmatpush.msra.mxu0 %v613
    %635 = vmatpush.msra.mxu0 %v612
    %636 = vmatpush.msra.mxu0 %v611
    %637 = vmatpush.msra.mxu0 %v610
    %638 = vmatpush.msra.mxu0 %v609
    %639 = vmatpush.msra.mxu0 %v608
    %640 = vmatmul.f32.gmra.mxu0 %v176
    %v641 = vpop.f32.mrf.mxu0
    %v642 = vadd.f32 0.0, %v641
    %643 = vdwg.mxu0
    %644 = vset.pattern.permute.xlu0 9
    %645 = vperm.xlu0 %644, %v216
    %v646 = vpop.permute.xlu0 %645
    %v648 = vmul.f32 %v646, %v642
    %v649 = vadd.f32 %v606, %v648
    %v650 = vld [vmem:[%s6] sm:$0x1]
    %v652 = vperm.slane %v650, 0
    %v654 = vadd.f32 %v649, %v652
    %v655 = vmax.f32 %v654, 0.0
    %v656 = vld [vmem:[#allocation8] sm:$0xff]
    %v657 = vld [vmem:[#allocation8 + $0x8] sm:$0xff]
    %v658 = vld [vmem:[#allocation8 + $0x10] sm:$0xff]
    %v659 = vld [vmem:[#allocation8 + $0x18] sm:$0xff]
    %v660 = vld [vmem:[#allocation8 + $0x20] sm:$0xff]
    %v661 = vld [vmem:[#allocation8 + $0x28] sm:$0xff]
    %v662 = vld [vmem:[#allocation8 + $0x30] sm:$0xff]
    %v663 = vld [vmem:[#allocation8 + $0x38] sm:$0xff]
    %v664 = vld [vmem:[#allocation8 + $0x40] sm:$0xff]
    %v665 = vld [vmem:[#allocation8 + $0x48] sm:$0xff]
    %v666 = vld [vmem:[#allocation8 + $0x50] sm:$0xff]
    %v667 = vld [vmem:[#allocation8 + $0x58] sm:$0xff]
    %v668 = vld [vmem:[#allocation8 + $0x60] sm:$0xff]
    %v669 = vld [vmem:[#allocation8 + $0x68] sm:$0xff]
    %v670 = vld [vmem:[#allocation8 + $0x70] sm:$0xff]
    %v671 = vld [vmem:[#allocation8 + $0x78] sm:$0xff]
    %v672 = vld [vmem:[%s8] sm:$0x1]
    %v674 = vperm.slane %v672, 0
    %676 = vmatpush.msra.mxu0 %v671
    %677 = vmatpush.msra.mxu0 %v670
    %678 = vmatpush.msra.mxu0 %v669
    %679 = vmatpush.msra.mxu0 %v668
    %680 = vmatpush.msra.mxu0 %v667
    %681 = vmatpush.msra.mxu0 %v666
    %682 = vmatpush.msra.mxu0 %v665
    %683 = vmatpush.msra.mxu0 %v664
    %684 = vmatpush.msra.mxu0 %v663
    %685 = vmatpush.msra.mxu0 %v662
    %686 = vmatpush.msra.mxu0 %v661
    %687 = vmatpush.msra.mxu0 %v660
    %688 = vmatpush.msra.mxu0 %v659
    %689 = vmatpush.msra.mxu0 %v658
    %690 = vmatpush.msra.mxu0 %v657
    %691 = vmatpush.msra.mxu0 %v656
    %692 = vmatmul.f32.gmra.mxu0 %v655
    %v693 = vpop.f32.mrf.mxu0
    %v694 = vadd.f32 %v674, %v693
    %695 = vdwg.mxu0
    %v696 = vsub.f32 0.0, %v694
    %v697 = vmul.f32 %v696, 1.442695
    %v698 = vpow.pop %v697
    %v699 = vadd.f32 %v698, 1.0
    %v700 = vrcp.pop %v699
    %v701 = vmul.f32 %v699, %v700
    %v702 = vsub.f32 1.0, %v701
    %v703 = vmul.f32 %v700, %v702
    %v704 = vadd.f32 %v700, %v703
    %vm705 = vweird.f32 %v699
    %vm706 = vweird.f32 %v700
    %vm707 = vmor %vm705, %vm706
    %v708 = vsel %vm707, %v700, %v704
    %v709 = vand.u32 2147483647, %v699
    %vm710 = vcmp.eq.f32.partialorder %v709, 8.507059e+37
    %v711 = vand.u32 %v699, 2147483648
    %v712 = vor.u32 1.1754944e-38, %v711
    %v713 = vsel %vm710, %v712, %v708
    %714 = vst [vmem:[%s11] sm:$0xff] %v713
    // Predicated region
    $region54: #{gfcd_eval_forward.1} parent=1 // pred_check
      _
    $region55: #{gfcd_eval_forward.1} parent=1 // pred_check_branch
      %716 = sbr.rel (0) target = $region57
    $region56: #{gfcd_eval_forward.1} parent=1 // pred_region
      %718 = vsyncadd [#allocation4], 0
      %s720 = sshll.u32 [#allocation10], 4
      %s721 = int_to_ptr.vmem [resolvable:$true] %s720
      %s722 = sshll.u32 %s9, 4
      %s723 = int_to_ptr.hbm [resolvable:$true] %s722
      %725 = dma.vmem_to_hbm [thread:$0]  %s721, 128, %s723, [#allocation4]
    $region57: #{gfcd_eval_forward.1} parent=1 // pred_fallthru
      _
    // Predicated region
    $region58: #{gfcd_eval_forward.1} parent=1 // pred_check
      _
    $region59: #{gfcd_eval_forward.1} parent=1 // pred_check_branch
      %727 = sbr.rel (0) target = $region61
    $region60: #{gfcd_eval_forward.1} parent=1 // pred_region
      %729 = vsyncadd [#allocation12], 0
      %s731 = sshll.u32 [#allocation11], 4
      %s732 = int_to_ptr.vmem [resolvable:$true] %s731
      %s733 = sshll.u32 %s10, 4
      %s734 = int_to_ptr.hbm [resolvable:$true] %s733
      %736 = dma.vmem_to_hbm [thread:$0]  %s732, 128, %s734, [#allocation12]
    $region61: #{gfcd_eval_forward.1} parent=1 // pred_fallthru
      _
    // Predicated region
    $region62: #{gfcd_eval_forward.1} parent=1 // pred_check
      _
    $region63: #{gfcd_eval_forward.1} parent=1 // pred_check_branch
      %738 = sbr.rel (0) target = $region65
    $region64: #{gfcd_eval_forward.1} parent=1 // pred_region
      _
    $region65: #{gfcd_eval_forward.1} parent=1 // pred_fallthru
      _
    // Predicated region
    $region66: #{gfcd_eval_forward.1} parent=1 // pred_check
      _
    $region67: #{gfcd_eval_forward.1} parent=1 // pred_check_branch
      %740 = sbr.rel (0) target = $region69
    $region68: #{gfcd_eval_forward.1} parent=1 // pred_region
      %742 = dma.done [#allocation4], 128
    $region69: #{gfcd_eval_forward.1} parent=1 // pred_fallthru
      _
    // Predicated region
    $region70: #{gfcd_eval_forward.1} parent=1 // pred_check
      _
    $region71: #{gfcd_eval_forward.1} parent=1 // pred_check_branch
      %744 = sbr.rel (0) target = $region73
    $region72: #{gfcd_eval_forward.1} parent=1 // pred_region
      %746 = dma.done [#allocation12], 128
    $region73: #{gfcd_eval_forward.1} parent=1 // pred_fallthru
      _
    // Predicated region
    $region74: #{gfcd_eval_forward.1} parent=1 // pred_check
      _
    $region75: #{gfcd_eval_forward.1} parent=1 // pred_check_branch
      %748 = sbr.rel (0) target = $region77
    $region76: #{gfcd_eval_forward.1} parent=1 // pred_region
      _
    $region77: #{gfcd_eval_forward.1} parent=1 // pred_fallthru
      _
    %749 = vsyncpa [#allocation3], 1
    %750 = vsyncpa [#allocation6], 1
    %751 = vsyncpa [#allocation9], 1
    %752 = vsyncpa [#allocation4], 1
    %753 = vsyncpa [#allocation12], 1

</llo_original>
